<compile_context>
chip_gen: v5e
topology: v5e:2x2
jax: 0.10.0
libtpu: 0.0.40
codegen_flags: <defaults>
</compile_context>

<pallas_src>
import math
import functools

import jax
import jax.numpy as jnp
from jax import lax
from jax.experimental import pallas as pl
from jax.experimental.pallas import tpu as pltpu

VMEM = pltpu.MemorySpace.VMEM
SMEM = pltpu.MemorySpace.SMEM

# Preferred tile sizes. Re-derive per TPU generation: v7x has 64 MiB VMEM (vs 128 MiB on
# v5e/v6e) -- halve EDGE_TILE / NODE_TILE there for large H. Small demos are clamped below.
EDGE_TILE = 1024    # edge rows per grid step (multiple of 128 -> lane-dense layouts)
NODE_TILE = 256     # node rows per grid step (multiple of 8)


def _round_up(x, m):
    return ((x + m - 1) // m) * m


def _pick_tile(n, pref, mult):
    """Tile size <= pref, multiple of mult; prefer >=2 tiles so 'parallel' grid axes
    shard across both v7x TensorCores."""
    n_min = _round_up(max(n, 1), mult)
    t = min(pref, n_min)
    if t == n_min and t > mult:
        t = _round_up(max(n_min // 2, mult), mult)
    return t


def _pad_rows(a, total, value=0):
    pad = [(0, total - a.shape[0])] + [(0, 0)] * (a.ndim - 1)
    return jnp.pad(a, pad, constant_values=value)


def _mosaic_params(dimension_semantics):
    try:
        cap = pltpu.get_tpu_info().vmem_capacity_bytes
        limit = int(min(cap // 2, 96 * 1024 * 1024))   # >=32MiB everywhere, 64MiB on v5e/v6e
    except Exception:
        limit = None
    return pltpu.CompilerParams(dimension_semantics=dimension_semantics,
                                vmem_limit_bytes=limit)


# ---------------------------------------------------------------------------
# Kernel 1: per-type adapt linear + tanh  (GNN.forward "adapt_ws" loop)
# ---------------------------------------------------------------------------
def adapt_kernel(x_ref, nt_ref, w_ref, b_ref, o_ref, *, num_types):
    f32 = jnp.float32
    x = x_ref[...].astype(jnp.bfloat16)          # (n_tile, in_dim)
    nt = nt_ref[...]                             # (n_tile, 1) int32
    acc = jnp.zeros(o_ref.shape, f32)
    # TODO(synk): type-sorted nodes + scalar-prefetched group offsets would make this
    # one GEMM per tile instead of num_types masked GEMMs.
    for t in range(num_types):
        h = jnp.tanh(jnp.dot(x, w_ref[t], preferred_element_type=f32) + b_ref[t])
        acc = acc + (nt == t).astype(f32) * h
    o_ref[...] = acc


def adapt_forward(x, nt2d, w_bf16, b_f32, *, node_tile):
    N_pad, in_dim = x.shape
    n_hid = w_bf16.shape[-1]
    kern = functools.partial(adapt_kernel, num_types=w_bf16.shape[0])
    return pl.pallas_call(
        kern,
        out_shape=jax.ShapeDtypeStruct((N_pad, n_hid), jnp.float32),
        grid=(N_pad // node_tile,),
        in_specs=[
            pl.BlockSpec((node_tile, in_dim), lambda i: (i, 0)),
            pl.BlockSpec((node_tile, 1), lambda i: (i, 0)),
            pl.BlockSpec(memory_space=VMEM),
            pl.BlockSpec(memory_space=VMEM),
        ],
        out_specs=pl.BlockSpec((node_tile, n_hid), lambda i: (i, 0)),
        compiler_params=_mosaic_params(("parallel",)),
    )(x, nt2d, w_bf16, b_f32)


# ---------------------------------------------------------------------------
# Kernel 2: per-node q/k/v per-type linears (N-row GEMMs instead of E-row GEMMs).
#   q uses the node's own type (= target type when gathered per edge);
#   k/v use the node's own type (= source type); the per-edge RTE contribution is
#   added later in the glue via precomputed (num_types, max_len, H) tables.
# ---------------------------------------------------------------------------
def node_qkv_kernel(x_ref, nt_ref, qw_ref, qb_ref, kw_ref, kb_ref, vw_ref, vb_ref,
                    q_ref, k_ref, v_ref, *, num_types):
    f32 = jnp.float32
    x = x_ref[...].astype(jnp.bfloat16)          # (n_tile, H)
    nt = nt_ref[...]                             # (n_tile, 1)
    q = jnp.zeros(q_ref.shape, f32)
    k = jnp.zeros(k_ref.shape, f32)
    v = jnp.zeros(v_ref.shape, f32)
    # TODO(synk): type-sorted nodes would make this one GEMM per group.
    for t in range(num_types):
        m = (nt == t).astype(f32)
        q = q + m * (jnp.dot(x, qw_ref[t], preferred_element_type=f32) + qb_ref[t])
        k = k + m * (jnp.dot(x, kw_ref[t], preferred_element_type=f32) + kb_ref[t])
        v = v + m * (jnp.dot(x, vw_ref[t], preferred_element_type=f32) + vb_ref[t])
    q_ref[...] = q
    k_ref[...] = k
    v_ref[...] = v


def node_qkv_forward(x, nt2d, lp, *, node_tile):
    N_pad, H = x.shape
    kern = functools.partial(node_qkv_kernel, num_types=lp["num_types"])
    full = pl.BlockSpec(memory_space=VMEM)
    blk = pl.BlockSpec((node_tile, H), lambda i: (i, 0))
    return pl.pallas_call(
        kern,
        out_shape=tuple(jax.ShapeDtypeStruct((N_pad, H), jnp.float32) for _ in range(3)),
        grid=(N_pad // node_tile,),
        in_specs=[blk, pl.BlockSpec((node_tile, 1), lambda i: (i, 0)),
                  full, full, full, full, full, full],
        out_specs=(blk, blk, blk),
        compiler_params=_mosaic_params(("parallel",)),
    )(x, nt2d, lp["qw"], lp["qb"], lp["kw"], lp["kb"], lp["vw"], lp["vb"])


# ---------------------------------------------------------------------------
# Kernel 3: per-edge relation GEMMs + attention logits.
#   bd_att (rel_pri/sqrt_dk folded) and bd_msg are block-diagonal (H,H) bf16 matrices;
#   logits are reduced with one 0/1 head block-sum matmul and written lane-dense as
#   (n_heads, E).  Messages are emitted bf16 (halved HBM).
# ---------------------------------------------------------------------------
def message_kernel(q_ref, k_ref, v_ref, et_ref, bd_att_ref, bd_msg_ref, head_ref,
                   att_t_ref, msg_ref, *, num_relations):
    f32 = jnp.float32
    k = k_ref[...]                               # (e_tile, H) bf16
    v = v_ref[...]                               # (e_tile, H) bf16
    et = et_ref[...]                             # (e_tile, 1) int32 relation type
    e_tile, H = k.shape

    kph = jnp.zeros((e_tile, H), f32)
    msg = jnp.zeros((e_tile, H), f32)
    # TODO(synk): relation-sorted edge groups (scalar-prefetch offsets) would make this
    # one GEMM per tile; on v5e consider per-head (d_k,d_k) GEMMs instead of the
    # block-diagonal (H,H) form when d_k >= 128.
    for r in range(num_relations):
        mr = (et == r).astype(f32)
        # bd_att[r] already contains rel_pri[r,h] / sqrt(d_k) folded in.
        kph = kph + mr * jnp.dot(k, bd_att_ref[r], preferred_element_type=f32)
        msg = msg + mr * jnp.dot(v, bd_msg_ref[r], preferred_element_type=f32)

    qk = q_ref[...].astype(f32) * kph            # (e_tile, H) f32
    # logits[h, e] = sum_{c in head h's d_k chunk} qk[e, c]   (A @ B^T pattern)
    att_t_ref[...] = lax.dot_general(
        head_ref[...], qk, dimension_numbers=(((1,), (1,)), ((), ())),
        preferred_element_type=f32)              # (n_heads, e_tile) lane-dense
    msg_ref[...] = msg.astype(jnp.bfloat16)


def message_forward(q_e, k_e, v_e, et, lp, *, edge_tile):
    E_pad, H = q_e.shape
    n_heads = lp["headmat"].shape[0]
    kern = functools.partial(message_kernel, num_relations=lp["num_relations"])
    full = pl.BlockSpec(memory_space=VMEM)
    eblk = pl.BlockSpec((edge_tile, H), lambda e: (e, 0))
    return pl.pallas_call(
        kern,
        out_shape=(
            jax.ShapeDtypeStruct((n_heads, E_pad), jnp.float32),   # logits, transposed
            jax.ShapeDtypeStruct((E_pad, H), jnp.bfloat16),        # messages
        ),
        grid=(E_pad // edge_tile,),
        in_specs=[
            eblk, eblk, eblk,
            pl.BlockSpec((edge_tile, 1), lambda e: (e, 0)),
            full, full, full,                     # bd_att bd_msg headmat
        ],
        out_specs=(
            pl.BlockSpec((n_heads, edge_tile), lambda e: (0, e)),
            eblk,
        ),
        compiler_params=_mosaic_params(("parallel",)),
    )(q_e, k_e, v_e, et, lp["bd_att"], lp["bd_msg"], lp["headmat"])


# ---------------------------------------------------------------------------
# Kernel 4: scatter-add of attention-weighted messages to target nodes.
#   Edges are target-sorted; per-node-tile edge-tile ranges are scalar-prefetched so
#   each node tile only streams its own edges (O(E) total work).  Resident f32 output
#   accumulator (pl.when init on first edge step), bf16 one-hot x bf16 wmsg on the MXU.
# ---------------------------------------------------------------------------
def aggregate_kernel(ts_ref, tc_ref, tgt_ref, wmsg_ref, o_ref):
    del ts_ref  # only used by the index maps
    i = pl.program_id(0)
    e = pl.program_id(1)

    @pl.when(e == 0)
    def _():
        o_ref[...] = jnp.zeros_like(o_ref)

    @pl.when(e < tc_ref[i])
    def _():
        n_tile = o_ref.shape[0]
        e_tile = wmsg_ref.shape[0]
        # subtract the node-tile offset from the (1, e_tile) targets (cheaper than
        # offsetting the full (n_tile, e_tile) iota every step)
        tgt_local = tgt_ref[...] - i * n_tile                        # (1, e_tile)
        rows = lax.broadcasted_iota(jnp.int32, (n_tile, e_tile), 0)
        onehot = (rows == tgt_local).astype(jnp.bfloat16)            # (n_tile, e_tile)
        o_ref[...] += jnp.dot(onehot, wmsg_ref[...],
                              preferred_element_type=jnp.float32)


def aggregate_forward(tile_start, tile_count, tgt_row, wmsg, N_pad,
                      *, node_tile, edge_tile, max_tiles):
    E_pad, H = wmsg.shape
    n_et = E_pad // edge_tile

    def eblk_map(i, e, ts, tc):
        return (jnp.minimum(ts[i] + e, n_et - 1), 0)

    def tgt_map(i, e, ts, tc):
        return (0, jnp.minimum(ts[i] + e, n_et - 1))

    return pl.pallas_call(
        aggregate_kernel,
        out_shape=jax.ShapeDtypeStruct((N_pad, H), jnp.float32),
        grid_spec=pltpu.PrefetchScalarGridSpec(
            num_scalar_prefetch=2,
            grid=(N_pad // node_tile, max_tiles),
            in_specs=[
                pl.BlockSpec((1, edge_tile), tgt_map),
                pl.BlockSpec((edge_tile, H), eblk_map),
            ],
            out_specs=pl.BlockSpec((node_tile, H), lambda i, e, ts, tc: (i, 0)),
        ),
        compiler_params=_mosaic_params(("parallel", "arbitrary")),
    )(tile_start, tile_count, tgt_row, wmsg)


# ---------------------------------------------------------------------------
# Kernel 5: HGTConv.update — per-type a_linear + sigmoid(skip)-gated residual
# ---------------------------------------------------------------------------
def update_kernel(g_ref, x_ref, nt_ref, aw_ref, ab_ref, alpha_ref, o_ref, *, num_types):
    f32 = jnp.float32
    g = g_ref[...].astype(jnp.bfloat16)          # gelu(aggr_out)
    x = x_ref[...]                               # layer input (residual), f32
    nt = nt_ref[...]
    acc = jnp.zeros(o_ref.shape, f32)
    # TODO(synk): type-sorted nodes would make this one GEMM per group.
    for t in range(num_types):
        mask = (nt == t).astype(f32)
        trans = jnp.dot(g, aw_ref[t], preferred_element_type=f32) + ab_ref[t]
        a = alpha_ref[t]                         # SMEM scalar = sigmoid(skip[t])
        acc = acc + mask * (trans * a + x * (1.0 - a))
    o_ref[...] = acc


def update_forward(g, x, nt2d, aw, ab, alpha, *, node_tile):
    N_pad, H = x.shape
    kern = functools.partial(update_kernel, num_types=aw.shape[0])
    blk = pl.BlockSpec((node_tile, H), lambda i: (i, 0))
    return pl.pallas_call(
        kern,
        out_shape=jax.ShapeDtypeStruct((N_pad, H), jnp.float32),
        grid=(N_pad // node_tile,),
        in_specs=[
            blk, blk,
            pl.BlockSpec((node_tile, 1), lambda i: (i, 0)),
            pl.BlockSpec(memory_space=VMEM),
            pl.BlockSpec(memory_space=VMEM),
            pl.BlockSpec(memory_space=SMEM),
        ],
        out_specs=blk,
        compiler_params=_mosaic_params(("parallel",)),
    )(g, x, nt2d, aw, ab, alpha)


# ---------------------------------------------------------------------------
# Parameter initialization (PyTorch-equivalent) + host-side folding / bf16 prep
# ---------------------------------------------------------------------------
def _linear_init(key, fin, fout):
    kw, kb = jax.random.split(key)
    bound = 1.0 / math.sqrt(fin)
    w = jax.random.uniform(kw, (fin, fout), jnp.float32, -bound, bound)
    b = jax.random.uniform(kb, (1, fout), jnp.float32, -bound, bound)
    return w, b


def _sinusoidal_table(max_len, n_hid):
    pos = jnp.arange(max_len, dtype=jnp.float32)[:, None]
    div = jnp.exp(jnp.arange(0, n_hid, 2, dtype=jnp.float32)
                  * (-math.log(10000.0) / n_hid))
    emb = jnp.zeros((max_len, n_hid), jnp.float32)
    emb = emb.at[:, 0::2].set(jnp.sin(pos * div) / math.sqrt(n_hid))
    emb = emb.at[:, 1::2].set(jnp.cos(pos * div) / math.sqrt(n_hid))
    return emb


def _block_diag(mats):
    """(n_heads, d_k, d_k) -> (H, H) block-diagonal."""
    n_heads, d_k, _ = mats.shape
    H = n_heads * d_k
    out = jnp.zeros((H, H), mats.dtype)
    for h in range(n_heads):
        out = out.at[h * d_k:(h + 1) * d_k, h * d_k:(h + 1) * d_k].set(mats[h])
    return out


def init_params(key, in_dim, n_hid, num_types, num_relations, n_heads, n_layers):
    d_k = n_hid // n_heads
    keys = iter(jax.random.split(key, 4096))
    adapt = [_linear_init(next(keys), in_dim, n_hid) for _ in range(num_types)]
    params = {"adapt_w": jnp.stack([w for w, _ in adapt]),
              "adapt_b": jnp.stack([b for _, b in adapt]),
              "layers": []}
    glorot = math.sqrt(6.0 / (d_k + d_k))
    for _ in range(n_layers):
        def stack():
            ws, bs = zip(*[_linear_init(next(keys), n_hid, n_hid)
                           for _ in range(num_types)])
            return jnp.stack(ws), jnp.stack(bs)
        kw, kb = stack(); qw, qb = stack(); vw, vb = stack(); aw, ab = stack()
        rel_att = jax.random.uniform(next(keys), (num_relations, n_heads, d_k, d_k),
                                     jnp.float32, -glorot, glorot)
        rel_msg = jax.random.uniform(next(keys), (num_relations, n_heads, d_k, d_k),
                                     jnp.float32, -glorot, glorot)
        rel_pri = jnp.ones((num_relations, n_heads), jnp.float32)
        skip = jnp.ones((num_types,), jnp.float32)
        rte_w, rte_b = _linear_init(next(keys), n_hid, n_hid)
        params["layers"].append(dict(kw=kw, kb=kb, qw=qw, qb=qb, vw=vw, vb=vb,
                                     aw=aw, ab=ab, rel_att=rel_att, rel_msg=rel_msg,
                                     rel_pri=rel_pri, skip=skip,
                                     rte_w=rte_w, rte_b=rte_b))
    return params


def prepare_params(params, n_heads, max_len=240):
    """Fold relation matrices (+ rel_pri / sqrt(d_k)) into block-diagonal (H,H) weights,
    pre-cast matmul operands to bf16 (biases stay f32), precompute the head block-sum
    matrix, and factor the RTE contribution of the k/v linears into small
    (num_types, max_len, H) tables (k_lin(x_j + rte) == k_lin(x_j) + rte @ Wk)."""
    n_hid = params["adapt_w"].shape[-1]
    num_types = params["adapt_w"].shape[0]
    d_k = n_hid // n_heads
    sqrt_dk = math.sqrt(d_k)
    headmat = jnp.kron(jnp.eye(n_heads, dtype=jnp.float32),
                       jnp.ones((1, d_k), jnp.float32))          # (n_heads, H)
    emb = _sinusoidal_table(max_len, n_hid)
    prep = {"adapt_w": params["adapt_w"].astype(jnp.bfloat16),
            "adapt_b": params["adapt_b"],
            "num_types": num_types,
            "n_heads": n_heads,
            "layers": []}
    for lp in params["layers"]:
        num_relations = lp["rel_att"].shape[0]
        bd_att = jnp.stack([
            _block_diag(lp["rel_att"][r]
                        * (lp["rel_pri"][r][:, None, None] / sqrt_dk))
            for r in range(num_relations)])
        bd_msg = jnp.stack([_block_diag(lp["rel_msg"][r])
                            for r in range(num_relations)])
        rte = emb @ lp["rte_w"] + lp["rte_b"]                     # (max_len, H) f32
        rte_k = jnp.einsum("mh,thf->tmf", rte, lp["kw"])          # (T, max_len, H)
        rte_v = jnp.einsum("mh,thf->tmf", rte, lp["vw"])
        prep["layers"].append(dict(
            qw=lp["qw"].astype(jnp.bfloat16), qb=lp["qb"],
            kw=lp["kw"].astype(jnp.bfloat16), kb=lp["kb"],
            vw=lp["vw"].astype(jnp.bfloat16), vb=lp["vb"],
            aw=lp["aw"].astype(jnp.bfloat16), ab=lp["ab"],
            bd_att=bd_att.astype(jnp.bfloat16),
            bd_msg=bd_msg.astype(jnp.bfloat16),
            alpha=jax.nn.sigmoid(lp["skip"]),
            rte_k=rte_k, rte_v=rte_v,
            headmat=headmat,
            num_types=num_types,
            num_relations=num_relations,
        ))
    return prep


# ---------------------------------------------------------------------------
# Forward pass (glue: gathers, grouped softmax, exact GELU)
# ---------------------------------------------------------------------------
def hgt_conv_forward(lp, x, nt2d, src, tgt, tj_e, et_pad, edge_time,
                     tgt_row, tile_start, tile_count, max_tiles,
                     N_pad, E, E_pad, node_tile, edge_tile):
    bf16 = jnp.bfloat16
    n_heads = lp["headmat"].shape[0]
    H = x.shape[1]
    d_k = H // n_heads

    # Per-node q/k/v (num_types masked GEMMs over N rows instead of E rows).
    qn, kn, vn = node_qkv_forward(x, nt2d, lp, node_tile=node_tile)

    # Per-edge gathers + RTE correction (glue), streamed as bf16.
    q_e = _pad_rows(qn[tgt].astype(bf16), E_pad)
    k_e = _pad_rows((kn[src] + lp["rte_k"][tj_e, edge_time]).astype(bf16), E_pad)
    v_e = _pad_rows((vn[src] + lp["rte_v"][tj_e, edge_time]).astype(bf16), E_pad)

    att_t, msg = message_forward(q_e, k_e, v_e, et_pad, lp, edge_tile=edge_tile)

    # pyg-style softmax grouped by target node (edges are target-sorted).
    # TODO(synk): fuse into the aggregate kernel (online per-node-tile softmax) to drop
    # the two segment scatters and the (E, n_heads) HBM round trip.
    logits = att_t[:, :E].T                                       # (E, n_heads)
    m = jax.ops.segment_max(logits, tgt, num_segments=N_pad, indices_are_sorted=True)
    p = jnp.exp(logits - m[tgt])
    s = jax.ops.segment_sum(p, tgt, num_segments=N_pad, indices_are_sorted=True)
    att = _pad_rows(p / (s[tgt] + 1e-16), E_pad)                  # padded edges weigh 0

    # Attention applied once per edge (hoisted out of the (node, edge) grid), bf16 stream.
    wmsg = (msg.astype(jnp.float32).reshape(E_pad, n_heads, d_k)
            * att[:, :, None]).reshape(E_pad, H).astype(bf16)

    aggr = aggregate_forward(tile_start, tile_count, tgt_row, wmsg, N_pad,
                             node_tile=node_tile, edge_tile=edge_tile,
                             max_tiles=max_tiles)

    # TODO(synk): exact (erf) GELU kept in JAX glue (no guaranteed Mosaic erf lowering);
    # this also blocks fusing the skip-gated update into the aggregate finalize branch.
    g = jax.nn.gelu(aggr, approximate=False)
    return update_forward(g, x, nt2d, lp["aw"], lp["ab"], lp["alpha"],
                          node_tile=node_tile)


def gnn_forward(prep, node_feature, node_type, edge_time, edge_index, edge_type):
    N = node_feature.shape[0]
    E = edge_index.shape[1]
    num_types = prep["num_types"]
    num_relations = prep["layers"][0]["num_relations"]

    node_tile = _pick_tile(N, NODE_TILE, 8)
    edge_tile = _pick_tile(E, EDGE_TILE, 128)
    N_pad = _round_up(N, node_tile)
    E_pad = _round_up(E, edge_tile)
    num_node_tiles = N_pad // node_tile

    x = _pad_rows(node_feature.astype(jnp.float32), N_pad)
    nt2d = _pad_rows(node_type.reshape(-1, 1).astype(jnp.int32), N_pad, num_types)

    # adapt_ws + tanh (Pallas); dropout = identity (eval mode)
    meta = adapt_forward(x, nt2d, prep["adapt_w"], prep["adapt_b"],
                         node_tile=node_tile)

    # Target-sort edges once (all layers share the graph) so the aggregate kernel only
    # streams each edge tile for the node tile(s) it belongs to.
    src = edge_index[0].astype(jnp.int32)
    tgt = edge_index[1].astype(jnp.int32)
    perm = jnp.argsort(tgt)
    src = src[perm]
    tgt = tgt[perm]
    edge_type_s = edge_type[perm].astype(jnp.int32)
    edge_time_s = edge_time[perm].astype(jnp.int32)
    tj_e = node_type[src].astype(jnp.int32)                       # source node type / edge

    # Per-node-tile edge-tile ranges (host-side, eager) for scalar prefetch.
    starts = jnp.arange(num_node_tiles, dtype=jnp.int32) * node_tile
    first_e = jnp.searchsorted(tgt, starts, side="left").astype(jnp.int32)
    last_e = jnp.searchsorted(tgt, starts + node_tile, side="left").astype(jnp.int32)
    tile_start = (first_e // edge_tile).astype(jnp.int32)
    tile_end = jnp.where(last_e > first_e, (last_e - 1) // edge_tile + 1, tile_start)
    tile_count = (tile_end - tile_start).astype(jnp.int32)
    max_tiles = max(int(jnp.max(tile_count)), 1)

    # Padded edges: sentinel relation (-> zero msg/logit) and sentinel target N_pad
    # (-> one-hot never matches any node row).
    et_pad = _pad_rows(edge_type_s.reshape(-1, 1), E_pad, num_relations)
    tgt_row = _pad_rows(tgt, E_pad, N_pad).reshape(1, E_pad).astype(jnp.int32)

    for lp in prep["layers"]:
        meta = hgt_conv_forward(lp, meta, nt2d, src, tgt, tj_e, et_pad, edge_time_s,
                                tgt_row, tile_start, tile_count, max_tiles,
                                N_pad, E, E_pad, node_tile, edge_tile)
    return meta[:N]


# ---------------------------------------------------------------------------
if __name__ == "__main__":
    # small synthetic graph
    N, E = 16, 32
    in_dim, n_hid = 16, 32
    num_types, num_relations, n_heads, n_layers = 2, 2, 4, 2

    key = jax.random.PRNGKey(0)
    k_feat, k_type, k_src, k_tgt, k_et, k_time, k_param = jax.random.split(key, 7)

    node_feature = jax.random.normal(k_feat, (N, in_dim), jnp.float32)
    node_type = jax.random.randint(k_type, (N,), 0, num_types, jnp.int32)
    edge_index = jnp.stack([
        jax.random.randint(k_src, (E,), 0, N, jnp.int32),   # source (j)
        jax.random.randint(k_tgt, (E,), 0, N, jnp.int32),   # target (i)
    ])
    edge_type = jax.random.randint(k_et, (E,), 0, num_relations, jnp.int32)
    edge_time = jax.random.randint(k_time, (E,), 0, 16, jnp.int32)

    raw = init_params(k_param, in_dim, n_hid, num_types, num_relations,
                      n_heads, n_layers)
    prep = prepare_params(raw, n_heads)

    out = gnn_forward(prep, node_feature, node_type, edge_time, edge_index, edge_type)
    out = jax.block_until_ready(out)
    assert out.shape == (N, n_hid) and out.dtype == jnp.float32
    print("KERNEL_OK")
</pallas_src>

<mosaic_0001>
module attributes {stable_mosaic.version = 11 : i64} {
  func.func @adapt_kernel(%arg0: i32, %arg1: memref<8x16xf32, #tpu.memory_space<vmem>>, %arg2: memref<8x1xi32, #tpu.memory_space<vmem>>, %arg3: memref<2x16x32xbf16, #tpu.memory_space<vmem>>, %arg4: memref<2x1x32xf32, #tpu.memory_space<vmem>>, %arg5: memref<8x32xf32, #tpu.memory_space<vmem>>) attributes {dimension_semantics = [#tpu.dimension_semantics<parallel>], iteration_bounds = array<i64: 2>, scalar_prefetch = 0 : i64, scratch_operands = 0 : i64, tpu.core_type = #tpu.core_type<tc>, window_params = [{transform_indices = @transform_0, window_bounds = array<i64: 8, 16>}, {transform_indices = @transform_1, window_bounds = array<i64: 8, 1>}, {pipeline_mode = #tpu.pipeline_mode<synchronous>, transform_indices = @transform_2, window_bounds = array<i64: 2, 16, 32>}, {pipeline_mode = #tpu.pipeline_mode<synchronous>, transform_indices = @transform_3, window_bounds = array<i64: 2, 1, 32>}, {transform_indices = @transform_4, window_bounds = array<i64: 8, 32>}]} {
    %c0 = arith.constant 0 : index
    %c0_0 = arith.constant 0 : index
    %0 = vector.load %arg1[%c0, %c0_0] : memref<8x16xf32, #tpu.memory_space<vmem>>, vector<8x16xf32>
    %1 = arith.truncf %0 : vector<8x16xf32> to vector<8x16xbf16>
    %c0_1 = arith.constant 0 : index
    %c0_2 = arith.constant 0 : index
    %2 = vector.load %arg2[%c0_1, %c0_2] : memref<8x1xi32, #tpu.memory_space<vmem>>, vector<8x1xi32>
    %cst = arith.constant 0.000000e+00 : f32
    %3 = vector.broadcast %cst : f32 to vector<8x32xf32>
    %c0_3 = arith.constant 0 : index
    %c0_4 = arith.constant 0 : index
    %c0_5 = arith.constant 0 : index
    %4 = vector.load %arg3[%c0_3, %c0_4, %c0_5] : memref<2x16x32xbf16, #tpu.memory_space<vmem>>, vector<1x16x32xbf16>
    %5 = vector.shape_cast %4 : vector<1x16x32xbf16> to vector<16x32xbf16>
    %cst_6 = arith.constant dense<0.000000e+00> : vector<8x32xf32>
    %6 = tpu.matmul %1, %5, %cst_6 {dimension_numbers = #tpu.dot_dimension_numbers<[1], [0], [0], [1], [0, 0, 1, 1], [], []>} : vector<8x16xbf16>, vector<16x32xbf16>, vector<8x32xf32> -> vector<8x32xf32>
    %c0_7 = arith.constant 0 : index
    %c0_8 = arith.constant 0 : index
    %c0_9 = arith.constant 0 : index
    %7 = vector.load %arg4[%c0_7, %c0_8, %c0_9] : memref<2x1x32xf32, #tpu.memory_space<vmem>>, vector<1x1x32xf32>
    %8 = vector.shape_cast %7 : vector<1x1x32xf32> to vector<1x32xf32>
    %9 = vector.broadcast %8 : vector<1x32xf32> to vector<8x32xf32>
    %10 = arith.addf %6, %9 : vector<8x32xf32>
    %11 = math.tanh %10 : vector<8x32xf32>
    %c0_i32 = arith.constant 0 : i32
    %12 = vector.broadcast %c0_i32 : i32 to vector<8x1xi32>
    %13 = arith.cmpi eq, %2, %12 : vector<8x1xi32>
    %14 = arith.extui %13 : vector<8x1xi1> to vector<8x1xi32>
    %15 = arith.sitofp %14 : vector<8x1xi32> to vector<8x1xf32>
    %16 = vector.broadcast %15 : vector<8x1xf32> to vector<8x32xf32>
    %17 = arith.mulf %16, %11 : vector<8x32xf32>
    %18 = arith.addf %3, %17 : vector<8x32xf32>
    %c1 = arith.constant 1 : index
    %c0_10 = arith.constant 0 : index
    %c0_11 = arith.constant 0 : index
    %19 = vector.load %arg3[%c1, %c0_10, %c0_11] : memref<2x16x32xbf16, #tpu.memory_space<vmem>>, vector<1x16x32xbf16>
    %20 = vector.shape_cast %19 : vector<1x16x32xbf16> to vector<16x32xbf16>
    %cst_12 = arith.constant dense<0.000000e+00> : vector<8x32xf32>
    %21 = tpu.matmul %1, %20, %cst_12 {dimension_numbers = #tpu.dot_dimension_numbers<[1], [0], [0], [1], [0, 0, 1, 1], [], []>} : vector<8x16xbf16>, vector<16x32xbf16>, vector<8x32xf32> -> vector<8x32xf32>
    %c1_13 = arith.constant 1 : index
    %c0_14 = arith.constant 0 : index
    %c0_15 = arith.constant 0 : index
    %22 = vector.load %arg4[%c1_13, %c0_14, %c0_15] : memref<2x1x32xf32, #tpu.memory_space<vmem>>, vector<1x1x32xf32>
    %23 = vector.shape_cast %22 : vector<1x1x32xf32> to vector<1x32xf32>
    %24 = vector.broadcast %23 : vector<1x32xf32> to vector<8x32xf32>
    %25 = arith.addf %21, %24 : vector<8x32xf32>
    %26 = math.tanh %25 : vector<8x32xf32>
    %c1_i32 = arith.constant 1 : i32
    %27 = vector.broadcast %c1_i32 : i32 to vector<8x1xi32>
    %28 = arith.cmpi eq, %2, %27 : vector<8x1xi32>
    %29 = arith.extui %28 : vector<8x1xi1> to vector<8x1xi32>
    %30 = arith.sitofp %29 : vector<8x1xi32> to vector<8x1xf32>
    %31 = vector.broadcast %30 : vector<8x1xf32> to vector<8x32xf32>
    %32 = arith.mulf %31, %26 : vector<8x32xf32>
    %33 = arith.addf %18, %32 : vector<8x32xf32>
    %c0_16 = arith.constant 0 : index
    %c0_17 = arith.constant 0 : index
    %34 = vector.load %arg5[%c0_16, %c0_17] : memref<8x32xf32, #tpu.memory_space<vmem>>, vector<8x32xf32>
    tpu.vector_store %arg5[%c0_16, %c0_17], %33 {strides = array<i32>} : memref<8x32xf32, #tpu.memory_space<vmem>>, vector<8x32xf32>,
    return
  }
  func.func @transform_0(%arg0: i32) -> (i32, i32) {
    %c0_i32 = arith.constant 0 : i32
    %c0_i32_0 = arith.constant 0 : i32
    return %arg0, %c0_i32 : i32, i32
  }
  func.func @transform_1(%arg0: i32) -> (i32, i32) {
    %c0_i32 = arith.constant 0 : i32
    %c0_i32_0 = arith.constant 0 : i32
    return %arg0, %c0_i32 : i32, i32
  }
  func.func @transform_2(%arg0: i32) -> (i32, i32, i32) {
    %c0_i32 = arith.constant 0 : i32
    %c0_i32_0 = arith.constant 0 : i32
    %c0_i32_1 = arith.constant 0 : i32
    %c0_i32_2 = arith.constant 0 : i32
    return %c0_i32, %c0_i32_0, %c0_i32_1 : i32, i32, i32
  }
  func.func @transform_3(%arg0: i32) -> (i32, i32, i32) {
    %c0_i32 = arith.constant 0 : i32
    %c0_i32_0 = arith.constant 0 : i32
    %c0_i32_1 = arith.constant 0 : i32
    %c0_i32_2 = arith.constant 0 : i32
    return %c0_i32, %c0_i32_0, %c0_i32_1 : i32, i32, i32
  }
  func.func @transform_4(%arg0: i32) -> (i32, i32) {
    %c0_i32 = arith.constant 0 : i32
    %c0_i32_0 = arith.constant 0 : i32
    return %arg0, %c0_i32 : i32, i32
  }
}

</mosaic_0001>

<llo_original>
// kernel: tpu_custom_call.1
$region0: #{tpu_custom_call.1}
  #allocation0 [shape = 'u32[]', space=smem, size = 0x4, offset = 0x4, fixed_abs, tag = 'smem constant byte address 0x4 - core index']
  #allocation1 [shape = 'u32[72,128]{1,0:T(1,128)}', space=vmem, size = 0x9000, scoped, tag = 'internal scratch']
  %s0 = inlined_call_operand.vmem [shape: f32[16,16], index: 0, kind: input, shape index: {}]
  %s1 = inlined_call_operand.vmem [shape: s32[16,1], index: 1, kind: input, shape index: {}]
  %s2 = inlined_call_operand.hbm [shape: bf16[2,16,32], index: 2, kind: input, shape index: {}]
  %s3 = inlined_call_operand.vmem [shape: f32[2,1,32], index: 3, kind: input, shape index: {}]
  %s4 = inlined_call_operand.hbm [shape: f32[16,32], index: 4, kind: output, shape index: {}]
  %s5 = sld [smem:[#allocation0]]
  $region53: #{tpu_custom_call.1} parent=0
    _
  %s7 = ssub.s32 1, %s5
  %s8 = scalar_select 0, %s7, %s5
  $region1: #{tpu_custom_call.1} parent=0
    #allocation2 [shape = 'u8[8192]{0}', space=vmem, size = 0x2000, scoped, tag = 'input window, operand 2, single buffered']
    #allocation3 [shape = 's32[2]{0}', space=sflag, size = 0x8, scoped, tag = 'scoped memory for tpu_custom_call.1']
    #allocation4 [shape = 's32[2]{0}', space=sflag, size = 0x8, scoped, tag = 'scoped memory for tpu_custom_call.1']
    #allocation5 [shape = 'u8[8192]{0}', space=vmem, size = 0x2000, scoped, tag = 'output window, operand 0']
    %9 = vsyncpa [#allocation3], 0
    %10 = vsyncpa [#allocation4], 0
    %s11 = scalar_lea.sflag [#allocation4], 1
    %12 = vsyncpa %s11, 0
    loop: start=0, step=1, limit=4
    $region2: #{tpu_custom_call.1} parent=1 // loop_pre_header
      _
    $region3: #{tpu_custom_call.1} parent=1 // loop_header
      %s14 = sphi 0, %s18
      %p15 = scmp.ge.s32.totalorder %s14, 4
      %s24 = sphi 0, %s26
      %s27 = sphi 0, %s24
      %s28 = sphi 0, %s27
      %s44 = sphi 0, %s28
      %s50 = sphi 0, %s52
      %s53 = sphi 0, %s50
      %s54 = sphi 0, %s53
      %s70 = sphi 0, %s54
      %s74 = sphi 0, %s74
      %s76 = sphi 0, %s74
      %s77 = sphi 0, %s76
      %s91 = sphi 0, %s77
      %s95 = sphi 0, %s95
      %s97 = sphi 0, %s95
      %s98 = sphi 0, %s97
      %s112 = sphi 0, %s98
      %s118 = sphi 0, %s120
      %s121 = sphi 0, %s118
      %s122 = sphi 0, %s121
      %s138 = sphi 0, %s122
    $region4: #{tpu_custom_call.1} parent=1 // loop_header_branch
      %17 = sbr.rel (%p15) target = $region8
    $region5: #{tpu_custom_call.1} parent=1 // loop_body
      %s19 = ssub.s32 %s14, 1
      %s20 = ssub.s32 %s14, 2
      %s21 = sadd.s32 %s14, 1
      %s22 = ssub.s32 %s14, %s21
      %p23 = scmp.eq.s32.totalorder %s22, 0
      %s25 = sadd.s32 %s24, 1
      %s26 = scalar_select %p23, %s24, %s25
      %p29 = pneg %p23
      %p30 = scmp.eq.s32.totalorder %s14, 1
      %p31 = por %p29, %p30
      %p32 = scmp.ne.s32.totalorder %s24, %s27
      %p33 = scmp.eq.s32.totalorder %s14, 0
      %p34 = por %p32, %p33
      %p35 = scmp.ne.s32.totalorder %s24, %s27
      %p36 = scmp.eq.s32.totalorder %s19, 1
      %p37 = por %p35, %p36
      %p38 = scmp.ne.s32.totalorder %s27, %s28
      %p39 = scmp.eq.s32.totalorder %s19, 0
      %p40 = por %p38, %p39
      %p41 = scmp.ne.s32.totalorder %s27, %s28
      %p42 = scmp.eq.s32.totalorder %s20, 1
      %p43 = por %p41, %p42
      %p45 = scmp.ne.s32.totalorder %s28, %s44
      %p46 = scmp.eq.s32.totalorder %s20, 0
      %p47 = por %p45, %p46
      %s48 = ssub.s32 %s14, %s21
      %p49 = scmp.eq.s32.totalorder %s48, 0
      %s51 = sadd.s32 %s50, 1
      %s52 = scalar_select %p49, %s50, %s51
      %p55 = pneg %p49
      %p56 = scmp.eq.s32.totalorder %s14, 1
      %p57 = por %p55, %p56
      %p58 = scmp.ne.s32.totalorder %s50, %s53
      %p59 = scmp.eq.s32.totalorder %s14, 0
      %p60 = por %p58, %p59
      %p61 = scmp.ne.s32.totalorder %s50, %s53
      %p62 = scmp.eq.s32.totalorder %s19, 1
      %p63 = por %p61, %p62
      %p64 = scmp.ne.s32.totalorder %s53, %s54
      %p65 = scmp.eq.s32.totalorder %s19, 0
      %p66 = por %p64, %p65
      %p67 = scmp.ne.s32.totalorder %s53, %s54
      %p68 = scmp.eq.s32.totalorder %s20, 1
      %p69 = por %p67, %p68
      %p71 = scmp.ne.s32.totalorder %s54, %s70
      %p72 = scmp.eq.s32.totalorder %s20, 0
      %p73 = por %p71, %p72
      %s75 = sadd.s32 %s74, 1
      %p78 = scmp.eq.s32.totalorder %s14, 1
      %p79 = scmp.ne.s32.totalorder %s74, %s76
      %p80 = scmp.eq.s32.totalorder %s14, 0
      %p81 = por %p79, %p80
      %p82 = scmp.ne.s32.totalorder %s74, %s76
      %p83 = scmp.eq.s32.totalorder %s19, 1
      %p84 = por %p82, %p83
      %p85 = scmp.ne.s32.totalorder %s76, %s77
      %p86 = scmp.eq.s32.totalorder %s19, 0
      %p87 = por %p85, %p86
      %p88 = scmp.ne.s32.totalorder %s76, %s77
      %p89 = scmp.eq.s32.totalorder %s20, 1
      %p90 = por %p88, %p89
      %p92 = scmp.ne.s32.totalorder %s77, %s91
      %p93 = scmp.eq.s32.totalorder %s20, 0
      %p94 = por %p92, %p93
      %s96 = sadd.s32 %s95, 1
      %p99 = scmp.eq.s32.totalorder %s14, 1
      %p100 = scmp.ne.s32.totalorder %s95, %s97
      %p101 = scmp.eq.s32.totalorder %s14, 0
      %p102 = por %p100, %p101
      %p103 = scmp.ne.s32.totalorder %s95, %s97
      %p104 = scmp.eq.s32.totalorder %s19, 1
      %p105 = por %p103, %p104
      %p106 = scmp.ne.s32.totalorder %s97, %s98
      %p107 = scmp.eq.s32.totalorder %s19, 0
      %p108 = por %p106, %p107
      %p109 = scmp.ne.s32.totalorder %s97, %s98
      %p110 = scmp.eq.s32.totalorder %s20, 1
      %p111 = por %p109, %p110
      %p113 = scmp.ne.s32.totalorder %s98, %s112
      %p114 = scmp.eq.s32.totalorder %s20, 0
      %p115 = por %p113, %p114
      %s116 = ssub.s32 %s14, %s21
      %p117 = scmp.eq.s32.totalorder %s116, 0
      %s119 = sadd.s32 %s118, 1
      %s120 = scalar_select %p117, %s118, %s119
      %p123 = pneg %p117
      %p124 = scmp.eq.s32.totalorder %s14, 1
      %p125 = por %p123, %p124
      %p126 = scmp.ne.s32.totalorder %s118, %s121
      %p127 = scmp.eq.s32.totalorder %s14, 0
      %p128 = por %p126, %p127
      %p129 = scmp.ne.s32.totalorder %s118, %s121
      %p130 = scmp.eq.s32.totalorder %s19, 1
      %p131 = por %p129, %p130
      %p132 = scmp.ne.s32.totalorder %s121, %s122
      %p133 = scmp.eq.s32.totalorder %s19, 0
      %p134 = por %p132, %p133
      %p135 = scmp.ne.s32.totalorder %s121, %s122
      %p136 = scmp.eq.s32.totalorder %s20, 1
      %p137 = por %p135, %p136
      %p139 = scmp.ne.s32.totalorder %s122, %s138
      %p140 = scmp.eq.s32.totalorder %s20, 0
      %p141 = por %p139, %p140
      %p142 = scmp.le.s32.totalorder 1, %s14
      %p143 = scmp.lt.s32.totalorder %s14, 3
      %p144 = pnand %p142, %p143
      %p145 = pneg %p144
      // Predicated region
      $region9: #{tpu_custom_call.1} parent=5 // pred_check
        _
      $region10: #{tpu_custom_call.1} parent=5 // pred_check_branch
        %147 = sbr.rel (%p144) target = $region12
      $region11: #{tpu_custom_call.1} parent=5 // pred_region
        %s148 = ssub.s32 %s14, 1
        // Predicated region
        $region13: #{tpu_custom_call.1} parent=11 // pred_check
          %p149 = pneg %p87
        $region14: #{tpu_custom_call.1} parent=11 // pred_check_branch
          %151 = sbr.rel (%p149) target = $region16
        $region15: #{tpu_custom_call.1} parent=11 // pred_region
          %153 = vsyncadd [#allocation3], 0
          %s154 = sshll.u32 %s2, 4
          %s155 = int_to_ptr.hbm [resolvable:$true] %s154
          %s156 = sshll.u32 [#allocation2], 4
          %s157 = int_to_ptr.vmem [resolvable:$true] %s156
          %162 = dma.hbm_to_vmem [thread:$0]  %s155, 256, %s157, [#allocation3], 64, 64, 4
        $region16: #{tpu_custom_call.1} parent=11 // pred_fallthru
          _
        // Predicated region
        $region17: #{tpu_custom_call.1} parent=11 // pred_check
          %p163 = pneg %p108
        $region18: #{tpu_custom_call.1} parent=11 // pred_check_branch
          %165 = sbr.rel (%p163) target = $region20
        $region19: #{tpu_custom_call.1} parent=11 // pred_region
          _
        $region20: #{tpu_custom_call.1} parent=11 // pred_fallthru
          _
      $region12: #{tpu_custom_call.1} parent=5 // pred_fallthru
        _
      %p166 = scmp.lt.s32.totalorder %s14, 2
      // Predicated region
      $region21: #{tpu_custom_call.1} parent=5 // pred_check
        %p167 = pneg %p166
      $region22: #{tpu_custom_call.1} parent=5 // pred_check_branch
        %169 = sbr.rel (%p167) target = $region24
      $region23: #{tpu_custom_call.1} parent=5 // pred_region
        // Predicated region
        $region25: #{tpu_custom_call.1} parent=23 // pred_check
          %p170 = pneg %p34
        $region26: #{tpu_custom_call.1} parent=23 // pred_check_branch
          %172 = sbr.rel (%p170) target = $region28
        $region27: #{tpu_custom_call.1} parent=23 // pred_region
          %p173 = scmp.lt.s32.totalorder %s14, 1
          %s174 = scalar_select %p173, %s14, 1
          %s175 = smul.addr %s174, 8
          %s176 = scalar_lea.vmem %s0, %s175
        $region28: #{tpu_custom_call.1} parent=23 // pred_fallthru
          _
        // Predicated region
        $region29: #{tpu_custom_call.1} parent=23 // pred_check
          %p177 = pneg %p60
        $region30: #{tpu_custom_call.1} parent=23 // pred_check_branch
          %179 = sbr.rel (%p177) target = $region32
        $region31: #{tpu_custom_call.1} parent=23 // pred_region
          %p180 = scmp.lt.s32.totalorder %s14, 1
          %s181 = scalar_select %p180, %s14, 1
          %s182 = smul.addr %s181, 8
          %s183 = scalar_lea.vmem %s1, %s182
        $region32: #{tpu_custom_call.1} parent=23 // pred_fallthru
          _
      $region24: #{tpu_custom_call.1} parent=5 // pred_fallthru
        _
      %p184 = scmp.le.s32.totalorder 1, %s14
      %p185 = scmp.lt.s32.totalorder %s14, 3
      %p186 = pnand %p184, %p185
      %p187 = pneg %p186
      // Predicated region
      $region33: #{tpu_custom_call.1} parent=5 // pred_check
        _
      $region34: #{tpu_custom_call.1} parent=5 // pred_check_branch
        %189 = sbr.rel (%p186) target = $region36
      $region35: #{tpu_custom_call.1} parent=5 // pred_region
        %s190 = ssub.s32 %s14, 1
        // Predicated region
        $region37: #{tpu_custom_call.1} parent=35 // pred_check
          %p191 = pneg %p87
        $region38: #{tpu_custom_call.1} parent=35 // pred_check_branch
          %193 = sbr.rel (%p191) target = $region40
        $region39: #{tpu_custom_call.1} parent=35 // pred_region
          %195 = dma.done [#allocation3], 256
        $region40: #{tpu_custom_call.1} parent=35 // pred_fallthru
          _
        %p196 = scmp.lt.s32.totalorder %s19, 1
        %s197 = scalar_select %p196, %s19, 1
        %s198 = smul.addr %s197, 8
        %s199 = scalar_lea.vmem %s0, %s198
        %p200 = pneg %p40
        %p201 = pneg %p37
        %p202 = scmp.lt.s32.totalorder %s19, 1
        %s203 = scalar_select %p202, %s19, 1
        %s204 = smul.addr %s203, 8
        %s205 = scalar_lea.vmem %s1, %s204
        %p206 = pneg %p66
        %p207 = pneg %p63
        %p208 = pneg %p87
        %p209 = pneg %p84
        %p210 = pneg %p108
        %p211 = pneg %p105
        %p212 = pneg %p134
        %p213 = pneg %p131
        %s214 = sand.u32 %s121, 1
        %s215 = scalar_lea.sflag [#allocation4], %s214
        %s216 = sand.u32 %s121, 1
        %s217 = smul.addr %s216, 8
        %s218 = scalar_lea.vmem [#allocation5], %s217
        %p219 = scmp.lt.s32.totalorder %s19, 1
        %s220 = scalar_select %p219, %s19, 1
        %s221 = smul.addr %s220, 8
        %s222 = scalar_lea.vmem %s0, %s221
        %p223 = scmp.lt.s32.totalorder %s19, 1
        %s224 = scalar_select %p223, %s19, 1
        %s225 = smul.addr %s224, 8
        %s226 = scalar_lea.vmem %s1, %s225
        %v228 = vld [vmem:[%s222] sm:$0xff]
        %v229 = vpack.c.bf16 %v228, %v228
        %v230 = vld [vmem:[%s226] sm:$0xff]
        %v231 = vld [vmem:[#allocation2] sm:$0xf]
        %v232 = vld [vmem:[#allocation2 + $0x4] sm:$0xf]
        %v233 = vld [vmem:[%s3] sm:$0x1]
        %v235 = vperm.slane %v233, 0
        %v239 = vunpack.c.l.b16 %v231
        %v240 = vunpack.c.l.b16 %v232
        %v241 = vpack.c.b16 %v240, %v239
        %vm243 = vcmask 130048
        %v245 = vsel %vm243, %v229, 0
        %247 = vmatpush.bf16.msra.mxu0 0
        %248 = vmatpush.bf16.msra.mxu0 0
        %249 = vmatpush.bf16.msra.mxu0 0
        %250 = vmatpush.bf16.msra.mxu0 0
        %251 = vmatpush.bf16.msra.mxu0 0
        %252 = vmatpush.bf16.msra.mxu0 0
        %253 = vmatpush.bf16.msra.mxu0 0
        %254 = vmatpush.bf16.msra.mxu0 %v241
        %255 = vmatmul.bf16.gmra.mxu0 %v245
        %v256 = vpop.f32.mrf.mxu0
        %v257 = vadd.f32 %v235, %v256
        %v258 = vpop.f32.mrf.mxu0
        %259 = vdwg.mxu0
        %v260 = vtanh.pop %v257
        %vm261 = vcmp.eq.s32.totalorder %v230, 0
        %v262 = vsel %vm261, 1, 0
        %v263 = vcvt.s32.f32 %v262
        %265 = vset.pattern.permute.xlu0 0
        %266 = vperm.xlu0 %265, %v263
        %v267 = vpop.permute.xlu0 %266
        %v269 = vmul.f32 %v267, %v260
        %v270 = vadd.f32 %v269, 0.0
        %s271 = scalar_lea.vmem [#allocation2], 8
        %v272 = vld [vmem:[%s271] sm:$0xf]
        %v273 = vld [vmem:[%s271 + $0x4] sm:$0xf]
        %s274 = scalar_lea.vmem %s3, 1
        %v275 = vld [vmem:[%s274] sm:$0x1]
        %v277 = vperm.slane %v275, 0
        %v281 = vunpack.c.l.b16 %v272
        %v282 = vunpack.c.l.b16 %v273
        %v283 = vpack.c.b16 %v282, %v281
        %285 = vmatpush.bf16.msra.mxu0 0
        %286 = vmatpush.bf16.msra.mxu0 0
        %287 = vmatpush.bf16.msra.mxu0 0
        %288 = vmatpush.bf16.msra.mxu0 0
        %289 = vmatpush.bf16.msra.mxu0 0
        %290 = vmatpush.bf16.msra.mxu0 0
        %291 = vmatpush.bf16.msra.mxu0 0
        %292 = vmatpush.bf16.msra.mxu0 %v283
        %293 = vmatmul.bf16.gmra.mxu0 %v245
        %v294 = vpop.f32.mrf.mxu0
        %v295 = vadd.f32 %v277, %v294
        %v296 = vpop.f32.mrf.mxu0
        %297 = vdwg.mxu0
        %v298 = vtanh.pop %v295
        %vm299 = vcmp.eq.s32.totalorder %v230, 1
        %v300 = vsel %vm299, 1, 0
        %v301 = vcvt.s32.f32 %v300
        %303 = vset.pattern.permute.xlu0 0
        %304 = vperm.xlu0 %303, %v301
        %v305 = vpop.permute.xlu0 %304
        %v307 = vmul.f32 %v305, %v298
        %v308 = vadd.f32 %v270, %v307
        %vm309 = vcmask 261120
        %310 = vst.msk [vmem:[%s218] sm:$0xff] %vm309, %v308
        %s311 = sand.u32 %s121, 1
        %s312 = scalar_lea.sflag [#allocation4], %s311
        %s313 = sand.u32 %s121, 1
        %s314 = smul.addr %s313, 8
        %s315 = scalar_lea.vmem [#allocation5], %s314
        // Predicated region
        $region41: #{tpu_custom_call.1} parent=35 // pred_check
          %p316 = pneg %p131
        $region42: #{tpu_custom_call.1} parent=35 // pred_check_branch
          %318 = sbr.rel (%p316) target = $region44
        $region43: #{tpu_custom_call.1} parent=35 // pred_region
          %320 = vsyncadd %s312, 0
          %s321 = smul.addr %s19, 8
          %s322 = scalar_lea.hbm %s4, %s321
          %s324 = sshll.u32 %s315, 4
          %s325 = int_to_ptr.vmem [resolvable:$true] %s324
          %s326 = sshll.u32 %s322, 4
          %s327 = int_to_ptr.hbm [resolvable:$true] %s326
          %329 = dma.vmem_to_hbm [thread:$0]  %s325, 128, %s327, %s312
        $region44: #{tpu_custom_call.1} parent=35 // pred_fallthru
          _
      $region36: #{tpu_custom_call.1} parent=5 // pred_fallthru
        _
      %p330 = scmp.le.s32.totalorder 2, %s14
      // Predicated region
      $region45: #{tpu_custom_call.1} parent=5 // pred_check
        %p331 = pneg %p330
      $region46: #{tpu_custom_call.1} parent=5 // pred_check_branch
        %333 = sbr.rel (%p331) target = $region48
      $region47: #{tpu_custom_call.1} parent=5 // pred_region
        %s334 = ssub.s32 %s14, 2
        // Predicated region
        $region49: #{tpu_custom_call.1} parent=47 // pred_check
          %p335 = pneg %p137
        $region50: #{tpu_custom_call.1} parent=47 // pred_check_branch
          %337 = sbr.rel (%p335) target = $region52
        $region51: #{tpu_custom_call.1} parent=47 // pred_region
          %s338 = sand.u32 %s122, 1
          %s339 = scalar_lea.sflag [#allocation4], %s338
          %s340 = sand.u32 %s122, 1
          %s341 = smul.addr %s340, 8
          %s342 = scalar_lea.vmem [#allocation5], %s341
          %344 = dma.done %s339, 128
        $region52: #{tpu_custom_call.1} parent=47 // pred_fallthru
          _
      $region48: #{tpu_custom_call.1} parent=5 // pred_fallthru
        _
    $region6: #{tpu_custom_call.1} parent=1 // loop_footer
      %s18 = sadd.s32 1, %s14
    $region7: #{tpu_custom_call.1} parent=1 // loop_footer_branch
      %13 = sbr.rel target = $region3
    $region8: #{tpu_custom_call.1} parent=1 // loop_exit
      _
    %345 = vsyncpa [#allocation3], 1
    %s346 = scalar_lea.sflag [#allocation3], 1
    %347 = vsyncpa %s346, 1
    %348 = vsyncpa [#allocation4], 1
    %s349 = scalar_lea.sflag [#allocation4], 1
    %350 = vsyncpa %s349, 1

</llo_original>
